<compile_context>
chip_gen: v7x
topology: tpu7x:2x2x1
jax: 0.10.0
libtpu: 0.0.40
codegen_flags: <defaults>
</compile_context>

<pallas_src>
import math
from functools import partial

import jax
import jax.numpy as jnp
from jax.experimental import pallas as pl
from jax.experimental.pallas import tpu as pltpu


def _round_up(x, m):
    return ((x + m - 1) // m) * m


# ----------------------------------------------------------------------------- kernel

def _token_embedding_kernel(scale, tok_ref, table_ref, out_ref):
    """One block of TB tokens: out = scale * onehot(tok) @ table.

    tok_ref:   (TB, 1) int32
    table_ref: (V, D)  full embedding table (resident across grid)
    out_ref:   (TB, D)
    """
    tok = tok_ref[...]                                   # (TB, 1)
    TB = tok.shape[0]
    V = table_ref.shape[0]

    # One-hot gather as a single MXU matmul (2-D iota; 1-D iota is not TPU-legal).
    col = jax.lax.broadcasted_iota(jnp.int32, (TB, V), 1)
    onehot = (tok == col).astype(table_ref.dtype)        # (TB, V)

    emb = jnp.dot(onehot, table_ref[...],
                  preferred_element_type=jnp.float32)    # (TB, D)
    out_ref[...] = (scale * emb).astype(out_ref.dtype)


# ----------------------------------------------------------------------------- wrapper

def token_embedding_pallas(tokens, table, *, block_tokens=256):
    """Equivalent of TokenEmbedding.forward: sqrt(D) * table[tokens].

    tokens: integer array of any shape (e.g. (B, L))
    table:  (charset_size, embed_dim) float array
    returns: tokens.shape + (embed_dim,)
    """
    V, D = table.shape
    scale = float(math.sqrt(D))

    lead_shape = tokens.shape
    flat = tokens.reshape(-1).astype(jnp.int32)
    N = flat.shape[0]

    # Fold the whole batch*seq into large token blocks (sublane-aligned).
    TB = min(_round_up(block_tokens, 8), _round_up(N, 8))
    Np = _round_up(N, TB)
    if Np != N:
        flat = jnp.pad(flat, (0, Np - N))                # pad with token id 0; sliced off below
    tok2d = flat.reshape(Np, 1)
    grid = (Np // TB,)

    itemsize = jnp.dtype(table.dtype).itemsize
    cost = pl.CostEstimate(
        flops=int(2 * Np * V * D),
        transcendentals=0,
        bytes_accessed=int(tok2d.size * 4 + V * D * itemsize + Np * D * itemsize),
    )

    out = pl.pallas_call(
        partial(_token_embedding_kernel, scale),
        out_shape=jax.ShapeDtypeStruct((Np, D), table.dtype),
        grid=grid,
        in_specs=[
            pl.BlockSpec((TB, 1), lambda i: (i, 0)),     # token ids for this block
            pl.BlockSpec((V, D), lambda i: (0, 0)),      # full table, constant index -> resident
        ],
        out_specs=pl.BlockSpec((TB, D), lambda i: (i, 0)),
        compiler_params=pltpu.CompilerParams(
            dimension_semantics=("parallel",)),          # token blocks are independent
        cost_estimate=cost,
    )(tok2d, table)

    return out[:N].reshape(*lead_shape, D)


# ----------------------------------------------------------------------------- main

if __name__ == "__main__":
    B, L = 2, 8          # batch, sequence length
    V, D = 97, 128       # charset_size, embed_dim (lane-dense D)

    key = jax.random.PRNGKey(0)
    k_tok, k_tab = jax.random.split(key)

    tokens = jax.random.randint(k_tok, (B, L), 0, V, dtype=jnp.int32)
    table = (0.02 * jax.random.normal(k_tab, (V, D))).astype(jnp.float32)

    out = token_embedding_pallas(tokens, table)
    jax.block_until_ready(out)

    # Pure-JAX reference: sqrt(embed_dim) * embedding(tokens)
    ref = math.sqrt(D) * table[tokens]

    assert out.shape == (B, L, D)
    max_err = float(jnp.max(jnp.abs(out - ref)))
    assert max_err < 1e-5, f"max abs error {max_err}"
    assert bool(jnp.all(jnp.isfinite(out)))
    print("KERNEL_OK")
</pallas_src>

<mosaic_0001>
module attributes {stable_mosaic.version = 11 : i64} {
  func.func @_token_embedding_kernel(%arg0: i32, %arg1: memref<16x1xi32, #tpu.memory_space<vmem>>, %arg2: memref<97x128xf32, #tpu.memory_space<vmem>>, %arg3: memref<16x128xf32, #tpu.memory_space<vmem>>) attributes {dimension_semantics = [#tpu.dimension_semantics<parallel>], iteration_bounds = array<i64: 1>, scalar_prefetch = 0 : i64, scratch_operands = 0 : i64, tpu.core_type = #tpu.core_type<tc>, window_params = [{transform_indices = @transform_0, window_bounds = array<i64: 16, 1>}, {pipeline_mode = #tpu.pipeline_mode<synchronous>, transform_indices = @transform_1, window_bounds = array<i64: 97, 128>}, {transform_indices = @transform_2, window_bounds = array<i64: 16, 128>}]} {
    %c0 = arith.constant 0 : index
    %c0_0 = arith.constant 0 : index
    %0 = vector.load %arg1[%c0, %c0_0] : memref<16x1xi32, #tpu.memory_space<vmem>>, vector<16x1xi32>
    %1 = tpu.iota {dimensions = array<i32: 1>} : vector<16x97xi32>
    %2 = vector.broadcast %0 : vector<16x1xi32> to vector<16x97xi32>
    %3 = arith.cmpi eq, %2, %1 : vector<16x97xi32>
    %4 = arith.extui %3 : vector<16x97xi1> to vector<16x97xi32>
    %5 = arith.sitofp %4 : vector<16x97xi32> to vector<16x97xf32>
    %c0_1 = arith.constant 0 : index
    %c0_2 = arith.constant 0 : index
    %6 = vector.load %arg2[%c0_1, %c0_2] : memref<97x128xf32, #tpu.memory_space<vmem>>, vector<97x128xf32>
    %cst = arith.constant dense<0.000000e+00> : vector<16x128xf32>
    %7 = tpu.matmul %5, %6, %cst {dimension_numbers = #tpu.dot_dimension_numbers<[1], [0], [0], [1], [0, 0, 1, 1], [], []>} : vector<16x97xf32>, vector<97x128xf32>, vector<16x128xf32> -> vector<16x128xf32>
    %cst_3 = arith.constant 11.3137083 : f32
    %8 = vector.broadcast %cst_3 : f32 to vector<16x128xf32>
    %9 = arith.mulf %8, %7 : vector<16x128xf32>
    %c0_4 = arith.constant 0 : index
    %c0_5 = arith.constant 0 : index
    %10 = vector.load %arg3[%c0_4, %c0_5] : memref<16x128xf32, #tpu.memory_space<vmem>>, vector<16x128xf32>
    tpu.vector_store %arg3[%c0_4, %c0_5], %9 {strides = array<i32>} : memref<16x128xf32, #tpu.memory_space<vmem>>, vector<16x128xf32>,
    return
  }
  func.func @transform_0(%arg0: i32) -> (i32, i32) {
    %c0_i32 = arith.constant 0 : i32
    %c0_i32_0 = arith.constant 0 : i32
    return %arg0, %c0_i32 : i32, i32
  }
  func.func @transform_1(%arg0: i32) -> (i32, i32) {
    %c0_i32 = arith.constant 0 : i32
    %c0_i32_0 = arith.constant 0 : i32
    %c0_i32_1 = arith.constant 0 : i32
    return %c0_i32, %c0_i32_0 : i32, i32
  }
  func.func @transform_2(%arg0: i32) -> (i32, i32) {
    %c0_i32 = arith.constant 0 : i32
    %c0_i32_0 = arith.constant 0 : i32
    return %arg0, %c0_i32 : i32, i32
  }
}

</mosaic_0001>

<llo_original>
// kernel: tpu_custom_call.1
$region0: #{tpu_custom_call.1}
  #allocation0 [shape = 'u32[]', space=smem, size = 0x4, offset = 0x4, fixed_abs, tag = 'smem constant byte address 0x4 - core index']
  #allocation1 [shape = 'u32[144,128]{1,0:T(1,128)}', space=vmem, size = 0x12000, scoped, tag = 'internal scratch']
  %s0 = inlined_call_operand.vmem [shape: s32[16,1], index: 0, kind: input, shape index: {}]
  %s1 = inlined_call_operand.hbm [shape: f32[97,128], index: 1, kind: input, shape index: {}]
  %s2 = inlined_call_operand.hbm [shape: f32[16,128], index: 2, kind: output, shape index: {}]
  %s3 = sld [smem:[#allocation0]]
  $region22: #{tpu_custom_call.1} parent=0
    _
  %s5 = ssub.s32 1, %s3
  %s6 = scalar_select 0, %s5, %s3
  $region1: #{tpu_custom_call.1} parent=0
    #allocation2 [shape = 'u8[53248]{0}', space=vmem, size = 0xd000, scoped, tag = 'input window, operand 1, single buffered']
    #allocation3 [shape = 's32[1]{0}', space=sflag, size = 0x4, scoped, tag = 'scoped memory for tpu_custom_call.1']
    #allocation4 [shape = 's32[1]{0}', space=sflag, size = 0x4, scoped, tag = 'scoped memory for tpu_custom_call.1']
    #allocation5 [shape = 'u8[8192]{0}', space=vmem, size = 0x2000, scoped, tag = 'output window, operand 0, single buffered']
    %7 = vsyncpa [#allocation3], 0
    %8 = vsyncpa [#allocation4], 0
    // Predicated region
    $region2: #{tpu_custom_call.1} parent=1 // pred_check
      _
    $region3: #{tpu_custom_call.1} parent=1 // pred_check_branch
      %10 = sbr.rel (0) target = $region5
    $region4: #{tpu_custom_call.1} parent=1 // pred_region
      _
    $region5: #{tpu_custom_call.1} parent=1 // pred_fallthru
      _
    // Predicated region
    $region6: #{tpu_custom_call.1} parent=1 // pred_check
      _
    $region7: #{tpu_custom_call.1} parent=1 // pred_check_branch
      %12 = sbr.rel (0) target = $region9
    $region8: #{tpu_custom_call.1} parent=1 // pred_region
      %s14 = ssub.s32 1664, 1664
      %15 = vsyncadd [#allocation3], %s14
      %s16 = sshll.u32 [#allocation2], 4
      %s17 = int_to_ptr.vmem [resolvable:$true] %s16
      %22 = dma.hbm_to_vmem [thread:$0]  %s1, 1664, %s17, [#allocation3], 128, 128, 8
    $region9: #{tpu_custom_call.1} parent=1 // pred_fallthru
      _
    // Predicated region
    $region10: #{tpu_custom_call.1} parent=1 // pred_check
      _
    $region11: #{tpu_custom_call.1} parent=1 // pred_check_branch
      %24 = sbr.rel (0) target = $region13
    $region12: #{tpu_custom_call.1} parent=1 // pred_region
      %25 = dma.done [#allocation3], 1664
    $region13: #{tpu_custom_call.1} parent=1 // pred_fallthru
      _
    %v26 = vld [vmem:[%s0] sm:$0xff]
    %v27 = vld [vmem:[%s0 + $0x8] sm:$0xff]
    %v28 = vlaneseq
    %v29 = vand.u32 %v28, 127
    %30 = vset.pattern.permute.xlu0 0
    %31 = vperm.xlu0 %30, %v26
    %v32 = vpop.permute.xlu0 %31
    %33 = vset.pattern.permute.xlu0 0
    %34 = vperm.xlu0 %33, %v27
    %v35 = vpop.permute.xlu0 %34
    %vm36 = vcmp.eq.s32.totalorder %v32, %v29
    %vm37 = vcmp.eq.s32.totalorder %v35, %v29
    %v38 = vsel %vm36, 1, 0
    %v39 = vsel %vm37, 1, 0
    %v40 = vcvt.s32.f32 %v38
    %v41 = vcvt.s32.f32 %v39
    %v42 = vld [vmem:[#allocation2] sm:$0xff]
    %v43 = vld [vmem:[#allocation2 + $0x8] sm:$0xff]
    %v44 = vld [vmem:[#allocation2 + $0x10] sm:$0xff]
    %v45 = vld [vmem:[#allocation2 + $0x18] sm:$0xff]
    %v46 = vld [vmem:[#allocation2 + $0x20] sm:$0xff]
    %v47 = vld [vmem:[#allocation2 + $0x28] sm:$0xff]
    %v48 = vld [vmem:[#allocation2 + $0x30] sm:$0xff]
    %v49 = vld [vmem:[#allocation2 + $0x38] sm:$0xff]
    %v50 = vld [vmem:[#allocation2 + $0x40] sm:$0xff]
    %v51 = vld [vmem:[#allocation2 + $0x48] sm:$0xff]
    %v52 = vld [vmem:[#allocation2 + $0x50] sm:$0xff]
    %v53 = vld [vmem:[#allocation2 + $0x58] sm:$0xff]
    %v54 = vld [vmem:[#allocation2 + $0x60] sm:$0x1]
    %vm55 = vcmask 793600
    %v57 = vsel %vm55, %v40, 0
    %v60 = vsel %vm55, %v41, 0
    %vm62 = vcmask 1040384
    %v64 = vsel %vm62, %v54, 0
    %66 = vmatprep.subr.mxu0 0.0
    %67 = vmatpush1.msra.mxu0 %v42
    %68 = vmatprep.subr.mxu0 0.0
    %69 = vmatpush1.msra.mxu0 %v43
    %70 = vmatprep.subr.mxu0 0.0
    %71 = vmatpush1.msra.mxu0 %v44
    %72 = vmatprep.subr.mxu0 0.0
    %73 = vmatpush1.msra.mxu0 %v45
    %74 = vmatprep.subr.mxu0 0.0
    %75 = vmatpush1.msra.mxu0 %v46
    %76 = vmatprep.subr.mxu0 0.0
    %77 = vmatpush1.msra.mxu0 %v47
    %78 = vmatprep.subr.mxu0 0.0
    %79 = vmatpush1.msra.mxu0 %v48
    %80 = vmatprep.subr.mxu0 0.0
    %81 = vmatpush1.msra.mxu0 %v49
    %82 = vmatprep.subr.mxu0 0.0
    %83 = vmatpush1.msra.mxu0 %v50
    %84 = vmatprep.subr.mxu0 0.0
    %85 = vmatpush1.msra.mxu0 %v51
    %86 = vmatprep.subr.mxu0 0.0
    %87 = vmatpush1.msra.mxu0 %v52
    %88 = vmatprep.subr.mxu0 0.0
    %89 = vmatpush1.msra.mxu0 %v53
    %90 = vmatprep.subr.mxu0 0.0
    %91 = vmatpush1.msra.mxu0 %v64
    %92 = vmatprep.subr.mxu0 0.0
    %93 = vmatpush1.msra.mxu0 0.0
    %94 = vmatprep.subr.mxu0 0.0
    %95 = vmatpush1.msra.mxu0 0.0
    %96 = vmatprep.subr.mxu0 0.0
    %97 = vmatpush1.msra.mxu0 0.0
    %98 = vmatprep.subr.mxu0 0.0
    %99 = vmatpush1.msra.mxu0 0.0
    %100 = vmatprep.subr.mxu0 0.0
    %101 = vmatpush1.msra.mxu0 0.0
    %102 = vmatprep.subr.mxu0 0.0
    %103 = vmatpush1.msra.mxu0 0.0
    %104 = vmatprep.subr.mxu0 0.0
    %105 = vmatpush1.msra.mxu0 0.0
    %106 = vmatprep.subr.mxu0 0.0
    %107 = vmatpush1.msra.mxu0 0.0
    %108 = vmatprep.subr.mxu0 0.0
    %109 = vmatpush1.msra.mxu0 0.0
    %110 = vmatprep.subr.mxu0 0.0
    %111 = vmatpush1.msra.mxu0 0.0
    %112 = vmatprep.subr.mxu0 0.0
    %113 = vmatpush1.msra.mxu0 0.0
    %114 = vmatprep.subr.mxu0 0.0
    %115 = vmatpush1.msra.mxu0 0.0
    %116 = vmatprep.subr.mxu0 0.0
    %117 = vmatpush1.msra.mxu0 0.0
    %118 = vmatprep.subr.mxu0 0.0
    %119 = vmatpush1.msra.mxu0 0.0
    %120 = vmatprep.subr.mxu0 0.0
    %121 = vmatpush1.msra.mxu0 0.0
    %122 = vmatprep.subr.mxu0 0.0
    %123 = vmatpush1.msra.mxu0 0.0
    %124 = vmatprep.subr.mxu0 0.0
    %125 = vmatpush1.msra.mxu0 0.0
    %126 = vmatprep.subr.mxu0 0.0
    %127 = vmatpush1.msra.mxu0 0.0
    %128 = vmatprep.subr.mxu0 0.0
    %129 = vmatpush1.msra.mxu0 0.0
    %130 = vmatprep.mubr.f32.mxu0 0.0
    %131 = vmatmul.mubr.f32.gmra.mrb[0].mxu0 %v57
    %v132 = vpop.f32.mrb[0].mxu0
    %v133 = vadd.f32 0.0, %v132
    %v134 = vpop.f32.mrb[0].mxu0
    %135 = vmatprep.mubr.f32.mxu0 0.0
    %136 = vmatmul.mubr.f32.gmra.mrb[0].mxu0 %v60
    %v137 = vpop.f32.mrb[0].mxu0
    %v138 = vadd.f32 0.0, %v137
    %v139 = vpop.f32.mrb[0].mxu0
    %140 = vdwg.mxu0
    %v141 = vmul.f32 %v133, 11.313708
    %v142 = vmul.f32 %v138, 11.313708
    %143 = vst [vmem:[#allocation5] sm:$0xff] %v141
    %144 = vst [vmem:[#allocation5 + $0x8] sm:$0xff] %v142
    // Predicated region
    $region14: #{tpu_custom_call.1} parent=1 // pred_check
      _
    $region15: #{tpu_custom_call.1} parent=1 // pred_check_branch
      %146 = sbr.rel (0) target = $region17
    $region16: #{tpu_custom_call.1} parent=1 // pred_region
      %s148 = ssub.s32 256, 256
      %149 = vsyncadd [#allocation4], %s148
      %s150 = sshll.u32 [#allocation5], 4
      %s151 = int_to_ptr.vmem [resolvable:$true] %s150
      %156 = dma.vmem_to_hbm [thread:$0]  %s151, 256, %s2, [#allocation4], 128, 128, 8
    $region17: #{tpu_custom_call.1} parent=1 // pred_fallthru
      _
    // Predicated region
    $region18: #{tpu_custom_call.1} parent=1 // pred_check
      _
    $region19: #{tpu_custom_call.1} parent=1 // pred_check_branch
      %158 = sbr.rel (0) target = $region21
    $region20: #{tpu_custom_call.1} parent=1 // pred_region
      %159 = dma.done [#allocation4], 256
    $region21: #{tpu_custom_call.1} parent=1 // pred_fallthru
      _
    %160 = vsyncpa [#allocation3], 1
    %161 = vsyncpa [#allocation4], 1

</llo_original>
